<compile_context>
chip_gen: v7x
topology: tpu7x:2x2x1
jax: 0.10.0
libtpu: 0.0.40
codegen_flags: <defaults>
</compile_context>

<pallas_src>
import functools

import jax
import jax.numpy as jnp
from jax.experimental import pallas as pl
from jax.experimental.pallas import tpu as pltpu


def _round_up(x, m):
    return (x + m - 1) // m * m


# ----------------------------------------------------------------------------
# Kernel
# ----------------------------------------------------------------------------
def _recon_loss_kernel(ids_ref,        # (B*Lp,) int32   SMEM (scalar prefetch)
                       emb_hbm,        # (V, Din) f32    HBM (pl.ANY)
                       cell_ref,       # (TL, H)         VMEM block of outside_h
                       mat_ref,        # (H, Din)        VMEM resident
                       emb_neg_ref,    # (K, Din) f32    VMEM resident
                       out_ref,        # (TL, 1) f32     VMEM block
                       emb_buf,        # (TL, Din) f32   VMEM scratch (gather dst)
                       gather_sem,     # DMA semaphore
                       *, margin, k_neg, tl, l_pad, compute_dtype):
    b = pl.program_id(0)
    lt = pl.program_id(1)
    row0 = b * l_pad + lt * tl

    # -- 1) issue the per-row embedding gather (overlaps the MXU matmul) -----
    def _issue(r, carry):
        tok = ids_ref[row0 + r]
        pltpu.make_async_copy(emb_hbm.at[tok], emb_buf.at[r], gather_sem).start()
        return carry

    jax.lax.fori_loop(0, tl, _issue, 0)

    # -- 2) MXU work that does not depend on the gathered rows ---------------
    #    z = cell @ mat (contract H -> Din); canonical (1),(0) contraction so
    #    the resident mat needs no per-tile transpose.
    cell = cell_ref[...].astype(compute_dtype)                     # (TL, H)
    z = jax.lax.dot_general(cell, mat_ref[...],
                            (((1,), (0,)), ((), ())),
                            preferred_element_type=jnp.float32)    # (TL, Din) f32

    # Negative scores on the VPU (K is tiny; a 128-lane padded MXU matmul
    # would be ~97% wasted work):  xn_k = <z, emb_neg[k]>
    xns = []
    for k in range(k_neg):
        nk = emb_neg_ref[k:k + 1, :].astype(jnp.float32)           # (1, Din)
        xns.append(jnp.sum(z * nk, axis=-1, keepdims=True))        # (TL, 1)

    # -- 3) wait for the gather, then the positive score ---------------------
    def _wait(r, carry):
        pltpu.make_async_copy(emb_hbm.at[0], emb_buf.at[r], gather_sem).wait()
        return carry

    jax.lax.fori_loop(0, tl, _wait, 0)

    #    xp = <emb_pos, z>  (== <emb_pos @ mat.T, cell>; emb stays f32, no MXU)
    xp = jnp.sum(emb_buf[...] * z, axis=-1, keepdims=True)         # (TL, 1) f32

    # -- 4) multi-margin hinge summed over the K negatives per row -----------
    total = jnp.zeros((tl, 1), jnp.float32)
    for xn_k in xns:
        total = total + jnp.maximum(0.0, margin - xp + xn_k)
    out_ref[...] = total


# ----------------------------------------------------------------------------
# Wrapper
# ----------------------------------------------------------------------------
def _choose_tile_rows(L, H, Din, K, cd_bytes, cell_bytes, tl_max, batch):
    """Pick the per-tile row count from a v7x-safe VMEM working-set budget."""
    budget = 20 * 1024 * 1024
    resident = 2 * H * Din * cd_bytes + 2 * K * Din * 4
    per_row = (2 * H * cell_bytes        # streamed cell block (double-buffered)
               + 2 * Din * 4             # gathered emb rows + z temporary
               + (H + Din) * cd_bytes    # casted temporaries
               + 16)
    avail = max(budget - resident, 8 * per_row)
    rows_fit = max(8, (avail // per_row) // 8 * 8)
    tl = min(int(tl_max), _round_up(L, 8), int(rows_fit))
    if batch == 1 and L > 8:
        # keep at least two grid tiles so both TensorCores stay busy on v7x
        tl = min(tl, _round_up(-(-L // 2), 8))
    return max(8, (tl // 8) * 8)


def reconstruction_loss(sentences, neg_samples, outside_h, embeddings, mat,
                        *, margin=1.0, compute_dtype=jnp.bfloat16, tl_max=512):
    """JAX/Pallas equivalent of ReconstructionLoss.forward.

    sentences:   (B, L)        int   token ids
    neg_samples: (K,)          int   token ids
    outside_h:   (B, T>=L, H)  f32   diora.outside_h
    embeddings:  (V, Din)      f32   embedding table
    mat:         (H, Din)      f32   projection parameter (size, input_size)
    """
    B, L = sentences.shape
    _, T, H = outside_h.shape
    V, Din = embeddings.shape
    K = int(neg_samples.shape[0])
    N = B * L

    cd_bytes = jnp.dtype(compute_dtype).itemsize
    cell_bytes = jnp.dtype(outside_h.dtype).itemsize

    tl = _choose_tile_rows(L, H, Din, K, cd_bytes, cell_bytes, tl_max, B)
    nlt = pl.cdiv(L, tl)
    l_pad = nlt * tl

    # cell blocks are read straight out of outside_h (no slice/cast/pad pass);
    # only pad when a block window would run past T (tiny-L edge case).
    if T < l_pad:
        outside_h = jnp.pad(outside_h, ((0, 0), (0, l_pad - T), (0, 0)))

    # Token ids for the in-kernel gather (padded rows point at row 0; their
    # hinge values are discarded by the `out[:, :L]` slice below).
    ids = jnp.pad(sentences.astype(jnp.int32), ((0, 0), (0, l_pad - L)))
    ids = ids.reshape(B * l_pad)

    emb_f32 = (embeddings if embeddings.dtype == jnp.float32
               else embeddings.astype(jnp.float32))
    mat_c = mat.astype(compute_dtype)                 # (H, Din), VMEM resident
    emb_neg = emb_f32[neg_samples]                    # (K, Din), tiny gather

    # VMEM footprint estimate -> scoped limit (derived from shapes, v7x-safe cap).
    est = (2 * tl * H * cell_bytes + 2 * tl * 4
           + 2 * tl * Din * 4 + tl * (H + Din) * cd_bytes
           + 2 * H * Din * cd_bytes + 2 * K * Din * 4 + (2 << 20))
    vmem_limit = int(min(max(est * 3 // 2, 32 * 1024 * 1024), 64 * 1024 * 1024))

    kernel = functools.partial(_recon_loss_kernel, margin=float(margin),
                               k_neg=K, tl=tl, l_pad=l_pad,
                               compute_dtype=compute_dtype)

    out = pl.pallas_call(
        kernel,
        out_shape=jax.ShapeDtypeStruct((B, l_pad, 1), jnp.float32),
        grid_spec=pltpu.PrefetchScalarGridSpec(
            num_scalar_prefetch=1,
            grid=(B, nlt),
            in_specs=[
                pl.BlockSpec(memory_space=pl.ANY),                           # embeddings stay in HBM
                pl.BlockSpec((None, tl, H), lambda b, lt, ids: (b, lt, 0)),  # cell tile (f32)
                pl.BlockSpec((H, Din), lambda b, lt, ids: (0, 0)),           # mat (resident)
                pl.BlockSpec((K, Din), lambda b, lt, ids: (0, 0)),           # emb_neg (resident)
            ],
            out_specs=pl.BlockSpec((None, tl, 1), lambda b, lt, ids: (b, lt, 0)),
            scratch_shapes=[
                pltpu.VMEM((tl, Din), jnp.float32),   # gathered embedding rows
                pltpu.SemaphoreType.DMA,              # gather completion
            ],
        ),
        compiler_params=pltpu.CompilerParams(
            dimension_semantics=("parallel", "parallel"),
            vmem_limit_bytes=vmem_limit,
        ),
    )(ids, emb_f32, outside_h, mat_c, emb_neg)

    # Rows l >= L (block padding / outside_h[:, L:] garbage) are sliced away
    # here, so no per-tile row/column masks are needed inside the kernel.
    # The final scalar mean (MultiMarginLoss reduction) is a trivial wrapper op.
    loss = out[:, :L, 0].sum() / (N * (K + 1))
    return loss, dict(reconstruction_loss=loss)


# ----------------------------------------------------------------------------
# References + test harness
# ----------------------------------------------------------------------------
def _reference_module_f32(sentences, neg_samples, outside_h, embeddings, mat,
                          *, margin=1.0):
    """Pure-f32 reference in the original PyTorch formulation."""
    B, L = sentences.shape
    K = int(neg_samples.shape[0])
    hp = jax.lax.Precision.HIGHEST
    emb_pos = embeddings[sentences]                            # (B, L, Din)
    emb_neg = embeddings[neg_samples]                          # (K, Din)
    cell = outside_h[:, :L]                                    # (B, L, H)
    proj_pos = jnp.einsum('bld,hd->blh', emb_pos, mat, precision=hp)
    proj_neg = jnp.einsum('kd,hd->kh', emb_neg, mat, precision=hp)
    xp = jnp.einsum('blh,blh->bl', proj_pos, cell, precision=hp)[..., None]
    xn = jnp.einsum('kh,blh->blk', proj_neg, cell, precision=hp)
    hinge = jnp.maximum(0.0, margin - xp + xn)
    return jnp.sum(hinge) / (B * L * (K + 1))


def _reference_kernel_math(sentences, neg_samples, outside_h, embeddings, mat,
                           *, margin=1.0, compute_dtype=jnp.bfloat16):
    """Mirrors the kernel's exact math (z = cell @ mat first) and dtypes."""
    B, L = sentences.shape
    K = int(neg_samples.shape[0])
    hp = jax.lax.Precision.HIGHEST
    cell = outside_h[:, :L].astype(compute_dtype)
    mat_c = mat.astype(compute_dtype)
    z = jnp.einsum('blh,hd->bld', cell, mat_c,
                   preferred_element_type=jnp.float32)
    emb_pos = embeddings[sentences].astype(jnp.float32)
    emb_neg = embeddings[neg_samples].astype(jnp.float32)
    xp = jnp.sum(emb_pos * z, axis=-1, keepdims=True)
    xn = jnp.einsum('bld,kd->blk', z, emb_neg, precision=hp)
    hinge = jnp.maximum(0.0, margin - xp + xn)
    return jnp.sum(hinge) / (B * L * (K + 1))


def _run_case(key, B, L, V, Din, H, K, margin, tl_max):
    k_emb, k_mat, k_out, k_sent, k_negk = jax.random.split(key, 5)
    embeddings = jax.random.normal(k_emb, (V, Din), dtype=jnp.float32)
    mat = jax.random.normal(k_mat, (H, Din), dtype=jnp.float32)
    T = max(2 * L - 1, L)
    outside_h = jax.random.normal(k_out, (B, T, H), dtype=jnp.float32)
    sentences = jax.random.randint(k_sent, (B, L), 0, V, dtype=jnp.int32)
    neg_samples = jax.random.randint(k_negk, (K,), 0, V, dtype=jnp.int32)

    loss, _ = reconstruction_loss(sentences, neg_samples, outside_h,
                                  embeddings, mat, margin=margin,
                                  compute_dtype=jnp.bfloat16, tl_max=tl_max)
    loss = jax.block_until_ready(loss)

    ref_mirror = _reference_kernel_math(sentences, neg_samples, outside_h,
                                        embeddings, mat, margin=margin,
                                        compute_dtype=jnp.bfloat16)
    ref_f32 = _reference_module_f32(sentences, neg_samples, outside_h,
                                    embeddings, mat, margin=margin)

    assert jnp.allclose(loss, ref_mirror, atol=1e-2, rtol=1e-3), (loss, ref_mirror)
    assert jnp.allclose(loss, ref_f32, atol=3e-1, rtol=5e-2), (loss, ref_f32)
    return loss


if __name__ == "__main__":
    key = jax.random.PRNGKey(0)
    ks = jax.random.split(key, 4)

    # 1) small shapes consistent with the module; one (b, l)-tile per batch row.
    _run_case(ks[0], B=2, L=8, V=32, Din=16, H=32, K=3, margin=1.0, tl_max=512)
    # 2) L not a multiple of 8 -> tile tail rows come from outside_h[:, L:] and
    #    are discarded by the wrapper-side slice.
    _run_case(ks[1], B=3, L=7, V=32, Din=16, H=32, K=3, margin=1.0, tl_max=512)
    # 3) forced small row tile -> multiple length-tiles per batch (grid 2x2).
    _run_case(ks[2], B=2, L=12, V=32, Din=16, H=32, K=3, margin=1.0, tl_max=8)
    # 4) tiny L where outside_h is shorter than one 8-row tile (pad path).
    _run_case(ks[3], B=2, L=4, V=32, Din=16, H=32, K=3, margin=1.0, tl_max=512)

    print("KERNEL_OK")
</pallas_src>

<mosaic_0001>
module attributes {stable_mosaic.version = 11 : i64} {
  func.func @_recon_loss_kernel(%arg0: i32, %arg1: i32, %arg2: memref<16xi32, #tpu.memory_space<smem>>, %arg3: memref<32x16xf32, #tpu.memory_space<any>>, %arg4: memref<1x8x32xf32, #tpu.memory_space<vmem>>, %arg5: memref<32x16xbf16, #tpu.memory_space<vmem>>, %arg6: memref<3x16xf32, #tpu.memory_space<vmem>>, %arg7: memref<1x8x1xf32, #tpu.memory_space<vmem>>, %arg8: memref<8x16xf32, #tpu.memory_space<vmem>>, %arg9: memref<!tpu.dma_semaphore, #tpu.memory_space<semaphore_mem>>) attributes {dimension_semantics = [#tpu.dimension_semantics<parallel>, #tpu.dimension_semantics<parallel>], iteration_bounds = array<i64: 2, 1>, scalar_prefetch = 1 : i64, scratch_operands = 2 : i64, tpu.core_type = #tpu.core_type<tc>, window_params = [{}, {transform_indices = @transform_1, window_bounds = array<i64: 1, 8, 32>}, {pipeline_mode = #tpu.pipeline_mode<synchronous>, transform_indices = @transform_2, window_bounds = array<i64: 32, 16>}, {pipeline_mode = #tpu.pipeline_mode<synchronous>, transform_indices = @transform_3, window_bounds = array<i64: 3, 16>}, {transform_indices = @transform_4, window_bounds = array<i64: 1, 8, 1>}]} {
    %c8_i32 = arith.constant 8 : i32
    %0 = arith.muli %arg0, %c8_i32 : i32
    %c8_i32_0 = arith.constant 8 : i32
    %1 = arith.muli %arg1, %c8_i32_0 : i32
    %2 = arith.addi %0, %1 : i32
    %c0_i32 = arith.constant 0 : i32
    %c8_i32_1 = arith.constant 8 : i32
    %3 = arith.addi %c0_i32, %c8_i32_1 : i32
    %c1_i32 = arith.constant 1 : i32
    scf.for %arg10 = %c0_i32 to %3 step %c1_i32  : i32 {
      %51 = arith.addi %2, %arg10 : i32
      %52 = arith.index_cast %51 : i32 to index
      %53 = memref.load %arg2[%52] : memref<16xi32, #tpu.memory_space<smem>>
      %c0_i32_31 = arith.constant 0 : i32
      %54 = tpu.memref_slice %arg3[%53, %c0_i32_31] : memref<32x16xf32, #tpu.memory_space<any>> -> memref<1x16xf32, #tpu.memory_space<any>>
      %55 = tpu.memref_squeeze %54 : memref<1x16xf32, #tpu.memory_space<any>> -> memref<16xf32, #tpu.memory_space<any>>
      %c0_i32_32 = arith.constant 0 : i32
      %56 = tpu.memref_slice %arg8[%arg10, %c0_i32_32] : memref<8x16xf32, #tpu.memory_space<vmem>> -> memref<1x16xf32, #tpu.memory_space<vmem>>
      %57 = tpu.memref_squeeze %56 : memref<1x16xf32, #tpu.memory_space<vmem>> -> memref<16xf32, #tpu.memory_space<vmem>>
      tpu.enqueue_dma source(%55 : memref<16xf32, #tpu.memory_space<any>>) target(%57 : memref<16xf32, #tpu.memory_space<vmem>>) target_semaphore(%arg9 : memref<!tpu.dma_semaphore, #tpu.memory_space<semaphore_mem>>)
    }
    %c8_i32_2 = arith.constant 8 : i32
    %c0 = arith.constant 0 : index
    %c0_3 = arith.constant 0 : index
    %c0_4 = arith.constant 0 : index
    %4 = vector.load %arg4[%c0, %c0_3, %c0_4] : memref<1x8x32xf32, #tpu.memory_space<vmem>>, vector<1x8x32xf32>
    %5 = vector.shape_cast %4 : vector<1x8x32xf32> to vector<8x32xf32>
    %6 = arith.truncf %5 : vector<8x32xf32> to vector<8x32xbf16>
    %c0_5 = arith.constant 0 : index
    %c0_6 = arith.constant 0 : index
    %7 = vector.load %arg5[%c0_5, %c0_6] : memref<32x16xbf16, #tpu.memory_space<vmem>>, vector<32x16xbf16>
    %cst = arith.constant dense<0.000000e+00> : vector<8x16xf32>
    %8 = tpu.matmul %6, %7, %cst {dimension_numbers = #tpu.dot_dimension_numbers<[1], [0], [0], [1], [0, 0, 1, 1], [], []>} : vector<8x32xbf16>, vector<32x16xbf16>, vector<8x16xf32> -> vector<8x16xf32>
    %c0_7 = arith.constant 0 : index
    %c0_8 = arith.constant 0 : index
    %9 = vector.load %arg6[%c0_7, %c0_8] : memref<3x16xf32, #tpu.memory_space<vmem>>, vector<1x16xf32>
    %10 = vector.broadcast %9 : vector<1x16xf32> to vector<8x16xf32>
    %11 = arith.mulf %8, %10 : vector<8x16xf32>
    %cst_9 = arith.constant dense<0.000000e+00> : vector<8xf32>
    %12 = vector.multi_reduction <add>, %11, %cst_9 [1] : vector<8x16xf32> to vector<8xf32>
    %13 = vector.shape_cast %12 : vector<8xf32> to vector<8x1xf32>
    %c1 = arith.constant 1 : index
    %c0_10 = arith.constant 0 : index
    %14 = vector.load %arg6[%c1, %c0_10] : memref<3x16xf32, #tpu.memory_space<vmem>>, vector<1x16xf32>
    %15 = vector.broadcast %14 : vector<1x16xf32> to vector<8x16xf32>
    %16 = arith.mulf %8, %15 : vector<8x16xf32>
    %cst_11 = arith.constant dense<0.000000e+00> : vector<8xf32>
    %17 = vector.multi_reduction <add>, %16, %cst_11 [1] : vector<8x16xf32> to vector<8xf32>
    %18 = vector.shape_cast %17 : vector<8xf32> to vector<8x1xf32>
    %c2 = arith.constant 2 : index
    %c0_12 = arith.constant 0 : index
    %19 = vector.load %arg6[%c2, %c0_12] : memref<3x16xf32, #tpu.memory_space<vmem>>, vector<1x16xf32>
    %20 = vector.broadcast %19 : vector<1x16xf32> to vector<8x16xf32>
    %21 = arith.mulf %8, %20 : vector<8x16xf32>
    %cst_13 = arith.constant dense<0.000000e+00> : vector<8xf32>
    %22 = vector.multi_reduction <add>, %21, %cst_13 [1] : vector<8x16xf32> to vector<8xf32>
    %23 = vector.shape_cast %22 : vector<8xf32> to vector<8x1xf32>
    %c0_i32_14 = arith.constant 0 : i32
    %c8_i32_15 = arith.constant 8 : i32
    %24 = arith.addi %c0_i32_14, %c8_i32_15 : i32
    %c1_i32_16 = arith.constant 1 : i32
    scf.for %arg10 = %c0_i32_14 to %24 step %c1_i32_16  : i32 {
      %c0_i32_31 = arith.constant 0 : i32
      %c0_i32_32 = arith.constant 0 : i32
      %51 = tpu.memref_slice %arg3[%c0_i32_31, %c0_i32_32] : memref<32x16xf32, #tpu.memory_space<any>> -> memref<1x16xf32, #tpu.memory_space<any>>
      %52 = tpu.memref_squeeze %51 : memref<1x16xf32, #tpu.memory_space<any>> -> memref<16xf32, #tpu.memory_space<any>>
      %c0_i32_33 = arith.constant 0 : i32
      %53 = tpu.memref_slice %arg8[%arg10, %c0_i32_33] : memref<8x16xf32, #tpu.memory_space<vmem>> -> memref<1x16xf32, #tpu.memory_space<vmem>>
      %54 = tpu.memref_squeeze %53 : memref<1x16xf32, #tpu.memory_space<vmem>> -> memref<16xf32, #tpu.memory_space<vmem>>
      tpu.wait_dma2 semaphore(%arg9 : memref<!tpu.dma_semaphore, #tpu.memory_space<semaphore_mem>>) src(%52 : memref<16xf32, #tpu.memory_space<any>>) dst(%54 : memref<16xf32, #tpu.memory_space<vmem>>)
    }
    %c8_i32_17 = arith.constant 8 : i32
    %c0_18 = arith.constant 0 : index
    %c0_19 = arith.constant 0 : index
    %25 = vector.load %arg8[%c0_18, %c0_19] : memref<8x16xf32, #tpu.memory_space<vmem>>, vector<8x16xf32>
    %26 = arith.mulf %25, %8 : vector<8x16xf32>
    %cst_20 = arith.constant dense<0.000000e+00> : vector<8xf32>
    %27 = vector.multi_reduction <add>, %26, %cst_20 [1] : vector<8x16xf32> to vector<8xf32>
    %28 = vector.shape_cast %27 : vector<8xf32> to vector<8x1xf32>
    %cst_21 = arith.constant 0.000000e+00 : f32
    %29 = vector.broadcast %cst_21 : f32 to vector<8x1xf32>
    %cst_22 = arith.constant 1.000000e+00 : f32
    %30 = vector.broadcast %cst_22 : f32 to vector<8x1xf32>
    %31 = arith.subf %30, %28 : vector<8x1xf32>
    %32 = arith.addf %31, %13 : vector<8x1xf32>
    %cst_23 = arith.constant 0.000000e+00 : f32
    %33 = vector.broadcast %cst_23 : f32 to vector<8x1xf32>
    %34 = arith.maximumf %33, %32 : vector<8x1xf32>
    %35 = arith.addf %29, %34 : vector<8x1xf32>
    %cst_24 = arith.constant 1.000000e+00 : f32
    %36 = vector.broadcast %cst_24 : f32 to vector<8x1xf32>
    %37 = arith.subf %36, %28 : vector<8x1xf32>
    %38 = arith.addf %37, %18 : vector<8x1xf32>
    %cst_25 = arith.constant 0.000000e+00 : f32
    %39 = vector.broadcast %cst_25 : f32 to vector<8x1xf32>
    %40 = arith.maximumf %39, %38 : vector<8x1xf32>
    %41 = arith.addf %35, %40 : vector<8x1xf32>
    %cst_26 = arith.constant 1.000000e+00 : f32
    %42 = vector.broadcast %cst_26 : f32 to vector<8x1xf32>
    %43 = arith.subf %42, %28 : vector<8x1xf32>
    %44 = arith.addf %43, %23 : vector<8x1xf32>
    %cst_27 = arith.constant 0.000000e+00 : f32
    %45 = vector.broadcast %cst_27 : f32 to vector<8x1xf32>
    %46 = arith.maximumf %45, %44 : vector<8x1xf32>
    %47 = arith.addf %41, %46 : vector<8x1xf32>
    %c0_28 = arith.constant 0 : index
    %c0_29 = arith.constant 0 : index
    %c0_30 = arith.constant 0 : index
    %48 = vector.load %arg7[%c0_28, %c0_29, %c0_30] : memref<1x8x1xf32, #tpu.memory_space<vmem>>, vector<1x8x1xf32>
    %49 = vector.shape_cast %48 : vector<1x8x1xf32> to vector<8x1xf32>
    %50 = vector.shape_cast %47 : vector<8x1xf32> to vector<1x8x1xf32>
    tpu.vector_store %arg7[%c0_28, %c0_29, %c0_30], %50 {strides = array<i32>} : memref<1x8x1xf32, #tpu.memory_space<vmem>>, vector<1x8x1xf32>,
    return
  }
  func.func @transform_1(%arg0: i32, %arg1: i32, %arg2: memref<16xi32, #tpu.memory_space<smem>>) -> (i32, i32, i32) {
    %c0_i32 = arith.constant 0 : i32
    %c0_i32_0 = arith.constant 0 : i32
    return %arg0, %arg1, %c0_i32 : i32, i32, i32
  }
  func.func @transform_2(%arg0: i32, %arg1: i32, %arg2: memref<16xi32, #tpu.memory_space<smem>>) -> (i32, i32) {
    %c0_i32 = arith.constant 0 : i32
    %c0_i32_0 = arith.constant 0 : i32
    %c0_i32_1 = arith.constant 0 : i32
    return %c0_i32, %c0_i32_0 : i32, i32
  }
  func.func @transform_3(%arg0: i32, %arg1: i32, %arg2: memref<16xi32, #tpu.memory_space<smem>>) -> (i32, i32) {
    %c0_i32 = arith.constant 0 : i32
    %c0_i32_0 = arith.constant 0 : i32
    %c0_i32_1 = arith.constant 0 : i32
    return %c0_i32, %c0_i32_0 : i32, i32
  }
  func.func @transform_4(%arg0: i32, %arg1: i32, %arg2: memref<16xi32, #tpu.memory_space<smem>>) -> (i32, i32, i32) {
    %c0_i32 = arith.constant 0 : i32
    %c0_i32_0 = arith.constant 0 : i32
    return %arg0, %arg1, %c0_i32 : i32, i32, i32
  }
}

</mosaic_0001>

<llo_original>
// kernel: tpu_custom_call.1
$region0: #{tpu_custom_call.1}
  #allocation0 [shape = 'u32[]', space=smem, size = 0x4, offset = 0x4, fixed_abs, tag = 'smem constant byte address 0x4 - core index']
  #allocation1 [shape = 'u32[144,128]{1,0:T(1,128)}', space=vmem, size = 0x12000, scoped, tag = 'internal scratch']
  #allocation2 [shape = 'f32[8,16]{1,0:T(8,128)}', space=vmem, size = 0x1000, scoped, tag = 'scratch operand']
  #allocation3 [shape = 's32[1]{0}', space=sflag, size = 0x4, scoped, tag = 'scratch operand']
  #allocation4 [shape = 's32[1]{0}', space=sflag, size = 0x4, scoped, tag = 'scoped memory for tpu_custom_call.1']
  #allocation5 [shape = 'u8[512]{0}', space=smem, size = 0x200, scoped, tag = 'prefetched SMEM operand 0']
  #allocation6 [shape = 's32[]', space=sflag, size = 0x4, offset = 0, fixed_abs, tag = 'sflag constant byte address 0x0 - dummy sync flag']
  %s0 = inlined_call_operand.vmem [shape: s32[16], index: 0, kind: input, shape index: {}]
  %s1 = inlined_call_operand.vmem [shape: f32[32,16], index: 1, kind: input, shape index: {}]
  %s2 = inlined_call_operand.vmem [shape: f32[2,15,32], index: 2, kind: input, shape index: {}]
  %s3 = inlined_call_operand.vmem [shape: bf16[32,16], index: 3, kind: input, shape index: {}]
  %s4 = inlined_call_operand.vmem [shape: f32[3,16], index: 4, kind: input, shape index: {}]
  %s5 = inlined_call_operand.vmem [shape: f32[2,8,1], index: 5, kind: output, shape index: {}]
  %s6 = sld [smem:[#allocation0]]
  $region89: #{tpu_custom_call.1} parent=0
    _
  %s8 = ssub.s32 1, %s6
  %s9 = scalar_select 0, %s8, %s6
  %s10 = sshll.u32 %s0, 4
  %s11 = int_to_ptr.vmem [resolvable:$true] %s10
  %13 = dma.vmem_to_smem %s11, 16, [#allocation5], [#allocation4]
  %14 = dma.done [#allocation4], 16
  %15 = sfence
  loop: start=0, step=1, limit=4
  $region2: #{tpu_custom_call.1} parent=0 // loop_pre_header
    _
  $region3: #{tpu_custom_call.1} parent=0 // loop_header
    %s17 = sphi 0, %s21
    %p18 = scmp.ge.s32.totalorder %s17, 4
    %s24 = sphi 0, %s36
    %s25 = sphi 0, %s32
    %s26 = sphi 0, %s24
    %s27 = sphi 0, %s25
    %s28 = sphi 0, %s26
    %s29 = sphi 0, %s27
    %s41 = sphi 0, %s43
    %s44 = sphi 0, %s41
    %s45 = sphi 0, %s44
    %s61 = sphi 0, %s45
    %s65 = sphi 0, %s65
    %s67 = sphi 0, %s65
    %s68 = sphi 0, %s67
    %s82 = sphi 0, %s68
    %s86 = sphi 0, %s86
    %s88 = sphi 0, %s86
    %s89 = sphi 0, %s88
    %s103 = sphi 0, %s89
    %s111 = sphi 0, %s113
    %s114 = sphi 0, %s111
    %s115 = sphi 0, %s114
    %s131 = sphi 0, %s115
  $region4: #{tpu_custom_call.1} parent=0 // loop_header_branch
    %20 = sbr.rel (%p18) target = $region8
  $region5: #{tpu_custom_call.1} parent=0 // loop_body
    %s22 = ssub.s32 %s17, 1
    %s23 = ssub.s32 %s17, 2
    %s30 = sadd.s32 1, %s25
    %p31 = scmp.ge.s32.totalorder %s30, 1
    %s32 = scalar_select %p31, 0, %s30
    %s33 = sadd.s32 1, %s24
    %s34 = scalar_select %p31, %s33, %s24
    %p35 = scmp.ge.s32.totalorder %s34, 2
    %s36 = scalar_select %p35, 0, %s34
    %s37 = ssub.s32 %s24, %s36
    %s38 = ssub.s32 %s25, %s32
    %s39 = sor.u32 %s37, %s38
    %p40 = scmp.eq.s32.totalorder %s39, 0
    %s42 = sadd.s32 %s41, 1
    %s43 = scalar_select %p40, %s41, %s42
    %p46 = pneg %p40
    %p47 = scmp.eq.s32.totalorder %s17, 1
    %p48 = por %p46, %p47
    %p49 = scmp.ne.s32.totalorder %s41, %s44
    %p50 = scmp.eq.s32.totalorder %s17, 0
    %p51 = por %p49, %p50
    %p52 = scmp.ne.s32.totalorder %s41, %s44
    %p53 = scmp.eq.s32.totalorder %s22, 1
    %p54 = por %p52, %p53
    %p55 = scmp.ne.s32.totalorder %s44, %s45
    %p56 = scmp.eq.s32.totalorder %s22, 0
    %p57 = por %p55, %p56
    %p58 = scmp.ne.s32.totalorder %s44, %s45
    %p59 = scmp.eq.s32.totalorder %s23, 1
    %p60 = por %p58, %p59
    %p62 = scmp.ne.s32.totalorder %s45, %s61
    %p63 = scmp.eq.s32.totalorder %s23, 0
    %p64 = por %p62, %p63
    %s66 = sadd.s32 %s65, 1
    %p69 = scmp.eq.s32.totalorder %s17, 1
    %p70 = scmp.ne.s32.totalorder %s65, %s67
    %p71 = scmp.eq.s32.totalorder %s17, 0
    %p72 = por %p70, %p71
    %p73 = scmp.ne.s32.totalorder %s65, %s67
    %p74 = scmp.eq.s32.totalorder %s22, 1
    %p75 = por %p73, %p74
    %p76 = scmp.ne.s32.totalorder %s67, %s68
    %p77 = scmp.eq.s32.totalorder %s22, 0
    %p78 = por %p76, %p77
    %p79 = scmp.ne.s32.totalorder %s67, %s68
    %p80 = scmp.eq.s32.totalorder %s23, 1
    %p81 = por %p79, %p80
    %p83 = scmp.ne.s32.totalorder %s68, %s82
    %p84 = scmp.eq.s32.totalorder %s23, 0
    %p85 = por %p83, %p84
    %s87 = sadd.s32 %s86, 1
    %p90 = scmp.eq.s32.totalorder %s17, 1
    %p91 = scmp.ne.s32.totalorder %s86, %s88
    %p92 = scmp.eq.s32.totalorder %s17, 0
    %p93 = por %p91, %p92
    %p94 = scmp.ne.s32.totalorder %s86, %s88
    %p95 = scmp.eq.s32.totalorder %s22, 1
    %p96 = por %p94, %p95
    %p97 = scmp.ne.s32.totalorder %s88, %s89
    %p98 = scmp.eq.s32.totalorder %s22, 0
    %p99 = por %p97, %p98
    %p100 = scmp.ne.s32.totalorder %s88, %s89
    %p101 = scmp.eq.s32.totalorder %s23, 1
    %p102 = por %p100, %p101
    %p104 = scmp.ne.s32.totalorder %s89, %s103
    %p105 = scmp.eq.s32.totalorder %s23, 0
    %p106 = por %p104, %p105
    %s107 = ssub.s32 %s24, %s36
    %s108 = ssub.s32 %s25, %s32
    %s109 = sor.u32 %s107, %s108
    %p110 = scmp.eq.s32.totalorder %s109, 0
    %s112 = sadd.s32 %s111, 1
    %s113 = scalar_select %p110, %s111, %s112
    %p116 = pneg %p110
    %p117 = scmp.eq.s32.totalorder %s17, 1
    %p118 = por %p116, %p117
    %p119 = scmp.ne.s32.totalorder %s111, %s114
    %p120 = scmp.eq.s32.totalorder %s17, 0
    %p121 = por %p119, %p120
    %p122 = scmp.ne.s32.totalorder %s111, %s114
    %p123 = scmp.eq.s32.totalorder %s22, 1
    %p124 = por %p122, %p123
    %p125 = scmp.ne.s32.totalorder %s114, %s115
    %p126 = scmp.eq.s32.totalorder %s22, 0
    %p127 = por %p125, %p126
    %p128 = scmp.ne.s32.totalorder %s114, %s115
    %p129 = scmp.eq.s32.totalorder %s23, 1
    %p130 = por %p128, %p129
    %p132 = scmp.ne.s32.totalorder %s115, %s131
    %p133 = scmp.eq.s32.totalorder %s23, 0
    %p134 = por %p132, %p133
    %p135 = scmp.le.s32.totalorder 1, %s17
    %p136 = scmp.lt.s32.totalorder %s17, 3
    %p137 = pnand %p135, %p136
    %p138 = pneg %p137
    // Predicated region
    $region9: #{tpu_custom_call.1} parent=5 // pred_check
      _
    $region10: #{tpu_custom_call.1} parent=5 // pred_check_branch
      %140 = sbr.rel (%p137) target = $region12
    $region11: #{tpu_custom_call.1} parent=5 // pred_region
      %s141 = ssub.s32 %s17, 1
      // Predicated region
      $region13: #{tpu_custom_call.1} parent=11 // pred_check
        %p142 = pneg %p78
      $region14: #{tpu_custom_call.1} parent=11 // pred_check_branch
        %144 = sbr.rel (%p142) target = $region16
      $region15: #{tpu_custom_call.1} parent=11 // pred_region
        _
      $region16: #{tpu_custom_call.1} parent=11 // pred_fallthru
        _
      // Predicated region
      $region17: #{tpu_custom_call.1} parent=11 // pred_check
        %p145 = pneg %p99
      $region18: #{tpu_custom_call.1} parent=11 // pred_check_branch
        %147 = sbr.rel (%p145) target = $region20
      $region19: #{tpu_custom_call.1} parent=11 // pred_region
        _
      $region20: #{tpu_custom_call.1} parent=11 // pred_fallthru
        _
    $region12: #{tpu_custom_call.1} parent=5 // pred_fallthru
      _
    %p148 = scmp.lt.s32.totalorder %s17, 2
    // Predicated region
    $region21: #{tpu_custom_call.1} parent=5 // pred_check
      %p149 = pneg %p148
    $region22: #{tpu_custom_call.1} parent=5 // pred_check_branch
      %151 = sbr.rel (%p149) target = $region24
    $region23: #{tpu_custom_call.1} parent=5 // pred_region
      // Predicated region
      $region25: #{tpu_custom_call.1} parent=23 // pred_check
        %p152 = pneg %p51
      $region26: #{tpu_custom_call.1} parent=23 // pred_check_branch
        %154 = sbr.rel (%p152) target = $region28
      $region27: #{tpu_custom_call.1} parent=23 // pred_region
        %p155 = scmp.lt.s32.totalorder %s24, 1
        %s156 = scalar_select %p155, %s24, 1
        %p157 = scmp.lt.s32.totalorder %s25, 1
        %s158 = scalar_select %p157, %s25, 1
        %s159 = smul.addr %s156, 2
        %s160 = sadd.s32 %s158, %s159
        %s161 = smul.addr %s160, 8
        %s162 = scalar_lea.vmem %s2, %s161
      $region28: #{tpu_custom_call.1} parent=23 // pred_fallthru
        _
    $region24: #{tpu_custom_call.1} parent=5 // pred_fallthru
      _
    %p163 = scmp.le.s32.totalorder 1, %s17
    %p164 = scmp.lt.s32.totalorder %s17, 3
    %p165 = pnand %p163, %p164
    %p166 = pneg %p165
    // Predicated region
    $region29: #{tpu_custom_call.1} parent=5 // pred_check
      _
    $region30: #{tpu_custom_call.1} parent=5 // pred_check_branch
      %168 = sbr.rel (%p165) target = $region32
    $region31: #{tpu_custom_call.1} parent=5 // pred_region
      %s169 = ssub.s32 %s17, 1
      %p170 = scmp.lt.s32.totalorder %s26, 1
      %s171 = scalar_select %p170, %s26, 1
      %p172 = scmp.lt.s32.totalorder %s27, 1
      %s173 = scalar_select %p172, %s27, 1
      %s174 = smul.addr %s171, 2
      %s175 = sadd.s32 %s173, %s174
      %s176 = smul.addr %s175, 8
      %s177 = scalar_lea.vmem %s2, %s176
      %p178 = pneg %p57
      %p179 = pneg %p54
      %p180 = pneg %p78
      %p181 = pneg %p75
      %p182 = pneg %p99
      %p183 = pneg %p96
      %p184 = pneg %p127
      %p185 = pneg %p124
      %p186 = scmp.lt.s32.totalorder %s26, 1
      %s187 = scalar_select %p186, %s26, 1
      %p188 = scmp.lt.s32.totalorder %s27, 0
      %s189 = scalar_select %p188, %s27, 0
      %s190 = sadd.s32 %s189, %s187
      %s191 = smul.addr %s190, 8
      %s192 = scalar_lea.vmem %s5, %s191
      %p193 = scmp.lt.s32.totalorder %s26, 1
      %s194 = scalar_select %p193, %s26, 1
      %p195 = scmp.lt.s32.totalorder %s27, 1
      %s196 = scalar_select %p195, %s27, 1
      %s197 = smul.addr %s194, 2
      %s198 = sadd.s32 %s196, %s197
      %s199 = smul.addr %s198, 8
      %s200 = scalar_lea.vmem %s2, %s199
      %p201 = scmp.lt.s32.totalorder %s26, 1
      %s202 = scalar_select %p201, %s26, 1
      %p203 = scmp.lt.s32.totalorder %s27, 0
      %s204 = scalar_select %p203, %s27, 0
      %s205 = sadd.s32 %s204, %s202
      %s206 = smul.addr %s205, 8
      %s207 = scalar_lea.vmem %s5, %s206
      %s209 = smul.u32 %s26, 8
      %s210 = smul.u32 %s27, 8
      %s211 = sadd.s32 %s209, %s210
      loop: start=0, step=1, limit=8
      $region33: #{tpu_custom_call.1} parent=31 // loop_pre_header
        _
      $region34: #{tpu_custom_call.1} parent=31 // loop_header
        %s213 = sphi 0, %s217
        %p214 = scmp.ge.s32.totalorder %s213, 8
      $region35: #{tpu_custom_call.1} parent=31 // loop_header_branch
        %216 = sbr.rel (%p214) target = $region39
      $region36: #{tpu_custom_call.1} parent=31 // loop_body
        %s218 = sadd.s32 %s211, %s213
        %s219 = sld [smem:[#allocation5 + %s218]]
        %s220 = scalar_lea.vmem %s1, %s219
        %s221 = scalar_lea.vmem [#allocation2], %s213
        %p223 = scmp.lt.u32.totalorder 1, 8
        %p224 = pneg %p223
        // Predicated region
        $region40: #{tpu_custom_call.1} parent=36 // pred_check
          _
        $region41: #{tpu_custom_call.1} parent=36 // pred_check_branch
          %226 = sbr.rel (%p223) target = $region43
        $region42: #{tpu_custom_call.1} parent=36 // pred_region
          %s241 = sand.u32 1, 7
          %p242 = scmp.eq.s32.totalorder %s241, 0
          %p243 = pneg %p242
          // Predicated region
          $region55: #{tpu_custom_call.1} parent=42 // pred_check
            _
          $region56: #{tpu_custom_call.1} parent=42 // pred_check_branch
            %245 = sbr.rel (%p242) target = $region58
          $region57: #{tpu_custom_call.1} parent=42 // pred_region
            %s246 = sand.u32 1, 7
            %s247 = ssub.s32 1, %s246
            %s248 = scalar_lea.vmem %s220, %s247
            %s249 = ssub.s32 1, %s246
            %s250 = scalar_lea.vmem %s221, %s249 [#allocation2]
            %s251 = sshllo.u32 0, %s246
            loop: start=0, step=1, limit=1
            $region59: #{tpu_custom_call.1} parent=57 // loop_pre_header
              _
            $region60: #{tpu_custom_call.1} parent=57 // loop_header
              %s253 = sphi 0, %s257
              %p254 = scmp.ge.s32.totalorder %s253, 1
              %s258 = sphi %s248, %s248
              %s259 = sphi %s250, %s250
            $region61: #{tpu_custom_call.1} parent=57 // loop_header_branch
              %256 = sbr.rel (%p254) target = $region65
            $region62: #{tpu_custom_call.1} parent=57 // loop_body
              %v260 = vld [vmem:[%s258] sm:%s251]
              %261 = vst [vmem:[%s259] sm:%s251] %v260
            $region63: #{tpu_custom_call.1} parent=57 // loop_footer
              %s257 = sadd.s32 1, %s253
            $region64: #{tpu_custom_call.1} parent=57 // loop_footer_branch
              %252 = sbr.rel target = $region60
            $region65: #{tpu_custom_call.1} parent=57 // loop_exit
              _
          $region58: #{tpu_custom_call.1} parent=42 // pred_fallthru
            _
        $region43: #{tpu_custom_call.1} parent=36 // pred_fallthru
          _
        // Predicated region
        $region44: #{tpu_custom_call.1} parent=36 // pred_check
          %p227 = pneg %p223
        $region45: #{tpu_custom_call.1} parent=36 // pred_check_branch
          %229 = sbr.rel (%p227) target = $region47
        $region46: #{tpu_custom_call.1} parent=36 // pred_region
          %s230 = sshllo.u32 0, 1
          loop: start=0, step=1, limit=1
          $region48: #{tpu_custom_call.1} parent=46 // loop_pre_header
            _
          $region49: #{tpu_custom_call.1} parent=46 // loop_header
            %s232 = sphi 0, %s236
            %p233 = scmp.ge.s32.totalorder %s232, 1
            %s237 = sphi %s220, %s220
            %s238 = sphi %s221, %s221
          $region50: #{tpu_custom_call.1} parent=46 // loop_header_branch
            %235 = sbr.rel (%p233) target = $region54
          $region51: #{tpu_custom_call.1} parent=46 // loop_body
            %v239 = vld [vmem:[%s237] sm:%s230]
            %240 = vst [vmem:[%s238] sm:%s230] %v239
          $region52: #{tpu_custom_call.1} parent=46 // loop_footer
            %s236 = sadd.s32 1, %s232
          $region53: #{tpu_custom_call.1} parent=46 // loop_footer_branch
            %231 = sbr.rel target = $region49
          $region54: #{tpu_custom_call.1} parent=46 // loop_exit
            _
        $region47: #{tpu_custom_call.1} parent=36 // pred_fallthru
          _
        // Predicated region
        $region66: #{tpu_custom_call.1} parent=36 // pred_check
          _
        $region67: #{tpu_custom_call.1} parent=36 // pred_check_branch
          %264 = sbr.rel (0) target = $region69
        $region68: #{tpu_custom_call.1} parent=36 // pred_region
          %265 = vsyncadd [#allocation3], 16
        $region69: #{tpu_custom_call.1} parent=36 // pred_fallthru
          _
      $region37: #{tpu_custom_call.1} parent=31 // loop_footer
        %s217 = sadd.s32 1, %s213
      $region38: #{tpu_custom_call.1} parent=31 // loop_footer_branch
        %212 = sbr.rel target = $region34
      $region39: #{tpu_custom_call.1} parent=31 // loop_exit
        _
      %v266 = vld [vmem:[%s200] sm:$0xff]
      %v267 = vpack.c.bf16 %v266, %v266
      %v268 = vld [vmem:[%s3] sm:$0xf]
      %v269 = vld [vmem:[%s3 + $0x4] sm:$0xf]
      %v270 = vld [vmem:[%s3 + $0x8] sm:$0xf]
      %v271 = vld [vmem:[%s3 + $0xc] sm:$0xf]
      %v276 = vunpack.c.l.b16 %v268
      %v277 = vunpack.c.l.b16 %v269
      %v278 = vunpack.c.l.b16 %v270
      %v279 = vunpack.c.l.b16 %v271
      %v280 = vpack.c.b16 %v277, %v276
      %v281 = vpack.c.b16 %v279, %v278
      %vm284 = vcmask 261120
      %v286 = vsel %vm284, %v267, 0
      %288 = vmatprep.subr.bf16.mxu0 0
      %289 = vmatpush1.bf16.msra.mxu0 %v280
      %290 = vmatprep.subr.bf16.mxu0 0
      %291 = vmatpush1.bf16.msra.mxu0 %v281
      %292 = vmatprep.subr.bf16.mxu0 0
      %293 = vmatpush1.bf16.msra.mxu0 0
      %294 = vmatprep.subr.bf16.mxu0 0
      %295 = vmatpush1.bf16.msra.mxu0 0
      %296 = vmatprep.subr.bf16.mxu0 0
      %297 = vmatpush1.bf16.msra.mxu0 0
      %298 = vmatprep.subr.bf16.mxu0 0
      %299 = vmatpush1.bf16.msra.mxu0 0
      %300 = vmatprep.subr.bf16.mxu0 0
      %301 = vmatpush1.bf16.msra.mxu0 0
      %302 = vmatprep.subr.bf16.mxu0 0
      %303 = vmatpush1.bf16.msra.mxu0 0
      %304 = vmatprep.subr.bf16.mxu0 0
      %305 = vmatpush1.bf16.msra.mxu0 0
      %306 = vmatprep.subr.bf16.mxu0 0
      %307 = vmatpush1.bf16.msra.mxu0 0
      %308 = vmatprep.subr.bf16.mxu0 0
      %309 = vmatpush1.bf16.msra.mxu0 0
      %310 = vmatprep.subr.bf16.mxu0 0
      %311 = vmatpush1.bf16.msra.mxu0 0
      %312 = vmatprep.subr.bf16.mxu0 0
      %313 = vmatpush1.bf16.msra.mxu0 0
      %314 = vmatprep.subr.bf16.mxu0 0
      %315 = vmatpush1.bf16.msra.mxu0 0
      %316 = vmatprep.subr.bf16.mxu0 0
      %317 = vmatpush1.bf16.msra.mxu0 0
      %318 = vmatprep.subr.bf16.mxu0 0
      %319 = vmatpush1.bf16.msra.mxu0 0
      %320 = vmatprep.mubr.bf16.mxu0 0
      %321 = vmatmul.mubr.bf16.gmra.mrb[0].mxu0 %v286
      %v322 = vpop.f32.mrb[0].mxu0
      %v323 = vadd.f32 0.0, %v322
      %v324 = vpop.f32.mrb[0].mxu0
      %v325 = vpop.f32.mrb[0].mxu0
      %v326 = vpop.f32.mrb[0].mxu0
      %327 = vdwg.mxu0
      %v328 = vld [vmem:[%s4] sm:$0x1]
      %v329 = vlaneseq
      %v330 = vshrl.u32 %v329, 7
      %v331 = vsub.s32 0, %v330
      %v332 = vrot.slane %v328, %v331
      %v333 = vmul.f32 %v323, %v332
      %vm334 = vcmask 130048
      %v335 = vsel %vm334, %v333, 0.0
      %336 = vadd.xlane.f32.xlu0 %v335
      %v337 = vpop.xlane.xlu0 %336
      %v338 = vld [vmem:[%s4 + $0x1] sm:$0x1]
      %v339 = vlaneseq
      %v340 = vshrl.u32 %v339, 7
      %v341 = vsub.s32 0, %v340
      %v342 = vrot.slane %v338, %v341
      %v343 = vmul.f32 %v323, %v342
      %v344 = vsel %vm334, %v343, 0.0
      %345 = vadd.xlane.f32.xlu0 %v344
      %v346 = vpop.xlane.xlu0 %345
      %v347 = vld [vmem:[%s4 + $0x2] sm:$0x1]
      %v348 = vlaneseq
      %v349 = vshrl.u32 %v348, 7
      %v350 = vsub.s32 0, %v349
      %v351 = vrot.slane %v347, %v350
      %v352 = vmul.f32 %v323, %v351
      %v353 = vsel %vm334, %v352, 0.0
      %354 = vadd.xlane.f32.xlu0 %v353
      %v355 = vpop.xlane.xlu0 %354
      loop: start=0, step=1, limit=8
      $region70: #{tpu_custom_call.1} parent=31 // loop_pre_header
        _
      $region71: #{tpu_custom_call.1} parent=31 // loop_header
        %s357 = sphi 0, %s361
        %p358 = scmp.ge.s32.totalorder %s357, 8
      $region72: #{tpu_custom_call.1} parent=31 // loop_header_branch
        %360 = sbr.rel (%p358) target = $region76
      $region73: #{tpu_custom_call.1} parent=31 // loop_body
        %363 = dma.done [#allocation3], 16
      $region74: #{tpu_custom_call.1} parent=31 // loop_footer
        %s361 = sadd.s32 1, %s357
      $region75: #{tpu_custom_call.1} parent=31 // loop_footer_branch
        %356 = sbr.rel target = $region71
      $region76: #{tpu_custom_call.1} parent=31 // loop_exit
        _
      %v364 = vld [vmem:[#allocation2] sm:$0xff]
      %v365 = vmul.f32 %v364, %v323
      %v366 = vsel %vm334, %v365, 0.0
      %367 = vadd.xlane.f32.xlu0 %v366
      %v368 = vpop.xlane.xlu0 %367
      %v369 = vsub.f32 1.0, %v368
      %v370 = vadd.f32 %v369, %v337
      %v371 = vmax.f32 %v370, 0.0
      %v372 = vadd.f32 %v371, 0.0
      %v373 = vadd.f32 %v369, %v346
      %v374 = vmax.f32 %v373, 0.0
      %v375 = vadd.f32 %v372, %v374
      %v376 = vadd.f32 %v369, %v355
      %v377 = vmax.f32 %v376, 0.0
      %v378 = vadd.f32 %v375, %v377
      %vm379 = vcmask 7168
      %380 = vst.msk [vmem:[%s207] sm:$0xff] %vm379, %v378
      %p381 = scmp.lt.s32.totalorder %s26, 1
      %s382 = scalar_select %p381, %s26, 1
      %p383 = scmp.lt.s32.totalorder %s27, 0
      %s384 = scalar_select %p383, %s27, 0
      %s385 = sadd.s32 %s384, %s382
      %s386 = smul.addr %s385, 8
      %s387 = scalar_lea.vmem %s5, %s386
      // Predicated region
      $region77: #{tpu_custom_call.1} parent=31 // pred_check
        %p388 = pneg %p124
      $region78: #{tpu_custom_call.1} parent=31 // pred_check_branch
        %390 = sbr.rel (%p388) target = $region80
      $region79: #{tpu_custom_call.1} parent=31 // pred_region
        _
      $region80: #{tpu_custom_call.1} parent=31 // pred_fallthru
        _
    $region32: #{tpu_custom_call.1} parent=5 // pred_fallthru
      _
    %p391 = scmp.le.s32.totalorder 2, %s17
    // Predicated region
    $region81: #{tpu_custom_call.1} parent=5 // pred_check
      %p392 = pneg %p391
    $region82: #{tpu_custom_call.1} parent=5 // pred_check_branch
      %394 = sbr.rel (%p392) target = $region84
    $region83: #{tpu_custom_call.1} parent=5 // pred_region
      %s395 = ssub.s32 %s17, 2
      // Predicated region
      $region85: #{tpu_custom_call.1} parent=83 // pred_check
        %p396 = pneg %p130
      $region86: #{tpu_custom_call.1} parent=83 // pred_check_branch
        %398 = sbr.rel (%p396) target = $region88
      $region87: #{tpu_custom_call.1} parent=83 // pred_region
        %p399 = scmp.lt.s32.totalorder %s28, 1
        %s400 = scalar_select %p399, %s28, 1
        %p401 = scmp.lt.s32.totalorder %s29, 0
        %s402 = scalar_select %p401, %s29, 0
        %s403 = sadd.s32 %s402, %s400
        %s404 = smul.addr %s403, 8
        %s405 = scalar_lea.vmem %s5, %s404
      $region88: #{tpu_custom_call.1} parent=83 // pred_fallthru
        _
    $region84: #{tpu_custom_call.1} parent=5 // pred_fallthru
      _
  $region6: #{tpu_custom_call.1} parent=0 // loop_footer
    %s21 = sadd.s32 1, %s17
  $region7: #{tpu_custom_call.1} parent=0 // loop_footer_branch
    %16 = sbr.rel target = $region3
  $region8: #{tpu_custom_call.1} parent=0 // loop_exit
    _
  %406 = vsyncmov [#allocation3]
  %s407 = vpop.sfrf %406
  %p408 = scmp.eq.s32.totalorder %s407, 0
  %p409 = pneg %p408
  %411 = shalt.err (%p409)

</llo_original>
